<compile_context>
chip_gen: v6e
topology: v6e:2x2x1
jax: 0.10.0
libtpu: 0.0.40
codegen_flags: <defaults>
</compile_context>

<pallas_src>
import functools

import jax
import jax.numpy as jnp
from jax import lax
from jax.experimental import pallas as pl
from jax.experimental.pallas import tpu as pltpu


def convlstm_cell_kernel(patch_ref, w_ref, b_ref, gamma_ref, beta_ref, c_ref,
                         h_out_ref, c_out_ref, *, hidden_dim, b_block, inv_n):
    """Processes `b_block` samples per grid step.

    patch_ref : (b_block, K_pad, H*W)   im2col patches (tap-major, then channel)
    w_ref     : (Cout, K_pad)           conv weight, K zero-padded
    b_ref     : (Cout, 1)               conv bias
    gamma_ref : (Cout, H*W)             LayerNorm weight
    beta_ref  : (Cout, H*W)             LayerNorm bias
    c_ref     : (b_block, hidden, H*W)  current cell state
    outputs   : (b_block, hidden, H*W)  h_next, c_next
    """
    for s in range(b_block):
        # --- conv as one im2col matmul on the MXU (default precision, f32 acc)
        acc = jnp.dot(w_ref[...], patch_ref[s],
                      preferred_element_type=jnp.float32)        # (Cout, H*W)
        acc = acc + b_ref[...]                                    # lane-broadcast

        # --- LayerNorm over the full [4*hidden, H, W] slab (fused reductions)
        s1 = jnp.sum(acc)
        s2 = jnp.sum(acc * acc)
        mean = s1 * inv_n
        var = s2 * inv_n - mean * mean
        normed = (acc - mean) * lax.rsqrt(var + 1e-5)
        normed = normed * gamma_ref[...] + beta_ref[...]

        # --- gates (sublane slices; order matches torch.split along dim=1) ---
        cc_i = normed[0 * hidden_dim:1 * hidden_dim]
        cc_f = normed[1 * hidden_dim:2 * hidden_dim]
        cc_o = normed[2 * hidden_dim:3 * hidden_dim]
        cc_g = normed[3 * hidden_dim:4 * hidden_dim]

        i = jax.nn.sigmoid(cc_i)
        f = jax.nn.sigmoid(cc_f)
        o = jax.nn.sigmoid(cc_o)
        g = jnp.tanh(cc_g)

        c_cur = c_ref[s]                                          # (hidden, H*W)
        c_next = f * c_cur + i * g
        h_next = o * jnp.tanh(c_next)

        h_out_ref[s] = h_next                                     # lane-dense
        c_out_ref[s] = c_next


def convlstm_cell(x_nchw, h_nchw, c_nchw, conv_w, conv_b, ln_gamma, ln_beta,
                  kernel_size=(3, 3)):
    """Pallas ConvLSTMCell forward. Inputs/outputs in NCHW (PyTorch layout)."""
    B, cin_x, H, W = x_nchw.shape
    hidden_dim = h_nchw.shape[1]
    Cin = cin_x + hidden_dim
    Cout = 4 * hidden_dim
    KH, KW = kernel_size
    ph, pw = KH // 2, KW // 2
    HW = H * W
    K = KH * KW * Cin
    K_pad = -(-K // 128) * 128                     # pad contraction dim to 128

    # ---- plain-JAX glue (no NCHW<->NHWC transposes; channel-first throughout)
    x = x_nchw.astype(jnp.float32)
    h = h_nchw.astype(jnp.float32)
    c = c_nchw.astype(jnp.float32).reshape(B, hidden_dim, HW)

    combined = jnp.concatenate([x, h], axis=1)                    # (B,Cin,H,W)
    combined_pad = jnp.pad(combined, ((0, 0), (0, 0), (ph, ph), (pw, pw)))
    taps = [combined_pad[:, :, kh:kh + H, kw:kw + W]
            for kh in range(KH) for kw in range(KW)]              # 9x (B,Cin,H,W)
    patches = jnp.stack(taps, axis=1).reshape(B, K, HW)           # (B, 108, 256)
    patches = jnp.pad(patches, ((0, 0), (0, K_pad - K), (0, 0)))  # (B, 128, 256)

    # (Cout, Cin, KH, KW) -> (Cout, KH*KW*Cin), tap-major then channel, pad K.
    w2 = jnp.transpose(conv_w.astype(jnp.float32), (0, 2, 3, 1)).reshape(Cout, K)
    w2 = jnp.pad(w2, ((0, 0), (0, K_pad - K)))                    # (Cout, 128)
    b2 = conv_b.astype(jnp.float32).reshape(Cout, 1)
    gamma = ln_gamma.astype(jnp.float32).reshape(Cout, HW)
    beta = ln_beta.astype(jnp.float32).reshape(Cout, HW)

    # Batch blocking: keep >= 2 grid steps (v7x megacore); block B/2 samples
    # per step for larger even batches (amortize per-step overhead on v5e/v6e).
    if B > 2 and B % 2 == 0:
        b_block = B // 2
    else:
        b_block = 1
    if B % b_block != 0:
        b_block = 1
    grid = (B // b_block,)

    kernel = functools.partial(convlstm_cell_kernel, hidden_dim=hidden_dim,
                               b_block=b_block, inv_n=1.0 / float(Cout * HW))

    h_flat, c_flat = pl.pallas_call(
        kernel,
        out_shape=(jax.ShapeDtypeStruct((B, hidden_dim, HW), jnp.float32),
                   jax.ShapeDtypeStruct((B, hidden_dim, HW), jnp.float32)),
        grid_spec=pltpu.PrefetchScalarGridSpec(
            num_scalar_prefetch=0,
            grid=grid,
            in_specs=[
                pl.BlockSpec((b_block, K_pad, HW), lambda i: (i, 0, 0)),
                pl.BlockSpec((Cout, K_pad), lambda i: (0, 0)),
                pl.BlockSpec((Cout, 1), lambda i: (0, 0)),
                pl.BlockSpec((Cout, HW), lambda i: (0, 0)),
                pl.BlockSpec((Cout, HW), lambda i: (0, 0)),
                pl.BlockSpec((b_block, hidden_dim, HW), lambda i: (i, 0, 0)),
            ],
            out_specs=(
                pl.BlockSpec((b_block, hidden_dim, HW), lambda i: (i, 0, 0)),
                pl.BlockSpec((b_block, hidden_dim, HW), lambda i: (i, 0, 0)),
            ),
        ),
        compiler_params=pltpu.CompilerParams(dimension_semantics=("parallel",)),
    )(patches, w2, b2, gamma, beta, c)

    return (h_flat.reshape(B, hidden_dim, H, W),
            c_flat.reshape(B, hidden_dim, H, W))


def convlstm_cell_reference(x, h, c, conv_w, conv_b, ln_gamma, ln_beta):
    """Pure-JAX NCHW reference mirroring the PyTorch forward (f32 golden)."""
    combined = jnp.concatenate([x, h], axis=1)
    out = lax.conv_general_dilated(
        combined, conv_w, window_strides=(1, 1), padding=((1, 1), (1, 1)),
        dimension_numbers=("NCHW", "OIHW", "NCHW"),
        precision=lax.Precision.HIGHEST)
    out = out + conv_b[None, :, None, None]
    mean = jnp.mean(out, axis=(1, 2, 3), keepdims=True)
    var = jnp.mean((out - mean) ** 2, axis=(1, 2, 3), keepdims=True)
    normed = (out - mean) * lax.rsqrt(var + 1e-5)
    normed = normed * ln_gamma[None] + ln_beta[None]
    cc_i, cc_f, cc_o, cc_g = jnp.split(normed, 4, axis=1)
    i = jax.nn.sigmoid(cc_i)
    f = jax.nn.sigmoid(cc_f)
    o = jax.nn.sigmoid(cc_o)
    g = jnp.tanh(cc_g)
    c_next = f * c + i * g
    h_next = o * jnp.tanh(c_next)
    return h_next, c_next


if __name__ == "__main__":
    # Module config (forward implies H = W = 64 / size).
    input_dim = 4
    hidden_dim = 8
    kernel_size = (3, 3)
    size = 4
    H = W = 64 // size          # 16
    B = 2
    Cin = input_dim + hidden_dim
    Cout = 4 * hidden_dim

    key = jax.random.PRNGKey(0)
    k_x, k_h, k_c, k_w, k_b, k_g, k_be = jax.random.split(key, 7)

    # Deterministic synthetic inputs / parameters (no checkpoint loading).
    x = jax.random.normal(k_x, (B, input_dim, H, W), jnp.float32)
    h_cur = jax.random.normal(k_h, (B, hidden_dim, H, W), jnp.float32)
    c_cur = jax.random.normal(k_c, (B, hidden_dim, H, W), jnp.float32)

    fan_in = Cin * kernel_size[0] * kernel_size[1]
    bound = 1.0 / (fan_in ** 0.5)
    conv_w = jax.random.uniform(k_w, (Cout, Cin, *kernel_size), jnp.float32,
                                -bound, bound)
    conv_b = jax.random.uniform(k_b, (Cout,), jnp.float32, -bound, bound)
    ln_gamma = 1.0 + 0.1 * jax.random.normal(k_g, (Cout, H, W), jnp.float32)
    ln_beta = 0.1 * jax.random.normal(k_be, (Cout, H, W), jnp.float32)

    # TODO(synk): dropout_prob is stored by the module but unused in forward; nothing to translate.

    h_next, c_next = convlstm_cell(x, h_cur, c_cur, conv_w, conv_b,
                                   ln_gamma, ln_beta, kernel_size)
    jax.block_until_ready((h_next, c_next))

    h_ref, c_ref = convlstm_cell_reference(x, h_cur, c_cur, conv_w, conv_b,
                                           ln_gamma, ln_beta)
    assert h_next.shape == (B, hidden_dim, H, W)
    assert c_next.shape == (B, hidden_dim, H, W)
    # Kernel matmul runs at default MXU precision (bf16 passes, f32 accumulate)
    # vs an f32 HIGHEST-precision golden reference, hence the 2e-2 tolerance;
    # gate outputs are O(1), so this still catches any structural error.
    assert jnp.allclose(h_next, h_ref, atol=2e-2, rtol=2e-2), \
        f"h mismatch: {jnp.max(jnp.abs(h_next - h_ref))}"
    assert jnp.allclose(c_next, c_ref, atol=2e-2, rtol=2e-2), \
        f"c mismatch: {jnp.max(jnp.abs(c_next - c_ref))}"

    print("KERNEL_OK")
</pallas_src>

<mosaic_0001>
module attributes {stable_mosaic.version = 11 : i64} {
  func.func @convlstm_cell_kernel(%arg0: i32, %arg1: memref<1x128x256xf32, #tpu.memory_space<vmem>>, %arg2: memref<32x128xf32, #tpu.memory_space<vmem>>, %arg3: memref<32x1xf32, #tpu.memory_space<vmem>>, %arg4: memref<32x256xf32, #tpu.memory_space<vmem>>, %arg5: memref<32x256xf32, #tpu.memory_space<vmem>>, %arg6: memref<1x8x256xf32, #tpu.memory_space<vmem>>, %arg7: memref<1x8x256xf32, #tpu.memory_space<vmem>>, %arg8: memref<1x8x256xf32, #tpu.memory_space<vmem>>) attributes {dimension_semantics = [#tpu.dimension_semantics<parallel>], iteration_bounds = array<i64: 2>, scalar_prefetch = 0 : i64, scratch_operands = 0 : i64, tpu.core_type = #tpu.core_type<tc>, window_params = [{transform_indices = @transform_0, window_bounds = array<i64: 1, 128, 256>}, {pipeline_mode = #tpu.pipeline_mode<synchronous>, transform_indices = @transform_1, window_bounds = array<i64: 32, 128>}, {pipeline_mode = #tpu.pipeline_mode<synchronous>, transform_indices = @transform_2, window_bounds = array<i64: 32, 1>}, {pipeline_mode = #tpu.pipeline_mode<synchronous>, transform_indices = @transform_3, window_bounds = array<i64: 32, 256>}, {pipeline_mode = #tpu.pipeline_mode<synchronous>, transform_indices = @transform_4, window_bounds = array<i64: 32, 256>}, {transform_indices = @transform_5, window_bounds = array<i64: 1, 8, 256>}, {transform_indices = @transform_6, window_bounds = array<i64: 1, 8, 256>}, {transform_indices = @transform_7, window_bounds = array<i64: 1, 8, 256>}]} {
    %c0 = arith.constant 0 : index
    %c0_0 = arith.constant 0 : index
    %0 = vector.load %arg2[%c0, %c0_0] : memref<32x128xf32, #tpu.memory_space<vmem>>, vector<32x128xf32>
    %c0_1 = arith.constant 0 : index
    %c0_2 = arith.constant 0 : index
    %c0_3 = arith.constant 0 : index
    %1 = vector.load %arg1[%c0_1, %c0_2, %c0_3] : memref<1x128x256xf32, #tpu.memory_space<vmem>>, vector<1x128x256xf32>
    %2 = vector.shape_cast %1 : vector<1x128x256xf32> to vector<128x256xf32>
    %cst = arith.constant dense<0.000000e+00> : vector<32x256xf32>
    %3 = tpu.matmul %0, %2, %cst {dimension_numbers = #tpu.dot_dimension_numbers<[1], [0], [0], [1], [0, 0, 1, 1], [], []>} : vector<32x128xf32>, vector<128x256xf32>, vector<32x256xf32> -> vector<32x256xf32>
    %c0_4 = arith.constant 0 : index
    %c0_5 = arith.constant 0 : index
    %4 = vector.load %arg3[%c0_4, %c0_5] : memref<32x1xf32, #tpu.memory_space<vmem>>, vector<32x1xf32>
    %5 = vector.broadcast %4 : vector<32x1xf32> to vector<32x256xf32>
    %6 = arith.addf %3, %5 : vector<32x256xf32>
    %7 = vector.shape_cast %6 : vector<32x256xf32> to vector<1x32x256xf32>
    %cst_6 = arith.constant dense<0.000000e+00> : vector<1xf32>
    %8 = vector.multi_reduction <add>, %7, %cst_6 [1, 2] : vector<1x32x256xf32> to vector<1xf32>
    %9 = vector.shape_cast %8 : vector<1xf32> to vector<1x1x1xf32>
    %10 = vector.extract %9[0, 0, 0] : f32 from vector<1x1x1xf32>
    %11 = arith.mulf %6, %6 : vector<32x256xf32>
    %12 = vector.shape_cast %11 : vector<32x256xf32> to vector<1x32x256xf32>
    %cst_7 = arith.constant dense<0.000000e+00> : vector<1xf32>
    %13 = vector.multi_reduction <add>, %12, %cst_7 [1, 2] : vector<1x32x256xf32> to vector<1xf32>
    %14 = vector.shape_cast %13 : vector<1xf32> to vector<1x1x1xf32>
    %15 = vector.extract %14[0, 0, 0] : f32 from vector<1x1x1xf32>
    %cst_8 = arith.constant 1.22070313E-4 : f32
    %16 = arith.mulf %10, %cst_8 : f32
    %cst_9 = arith.constant 1.22070313E-4 : f32
    %17 = arith.mulf %15, %cst_9 : f32
    %18 = arith.mulf %16, %16 : f32
    %19 = arith.subf %17, %18 : f32
    %20 = vector.broadcast %16 : f32 to vector<32x256xf32>
    %21 = arith.subf %6, %20 : vector<32x256xf32>
    %cst_10 = arith.constant 9.99999974E-6 : f32
    %22 = arith.addf %19, %cst_10 : f32
    %23 = math.rsqrt %22 : f32
    %24 = vector.broadcast %23 : f32 to vector<32x256xf32>
    %25 = arith.mulf %21, %24 : vector<32x256xf32>
    %c0_11 = arith.constant 0 : index
    %c0_12 = arith.constant 0 : index
    %26 = vector.load %arg4[%c0_11, %c0_12] : memref<32x256xf32, #tpu.memory_space<vmem>>, vector<32x256xf32>
    %27 = arith.mulf %25, %26 : vector<32x256xf32>
    %c0_13 = arith.constant 0 : index
    %c0_14 = arith.constant 0 : index
    %28 = vector.load %arg5[%c0_13, %c0_14] : memref<32x256xf32, #tpu.memory_space<vmem>>, vector<32x256xf32>
    %29 = arith.addf %27, %28 : vector<32x256xf32>
    %30 = vector.extract_strided_slice %29 {offsets = [0, 0], sizes = [8, 256], strides = [1, 1]} : vector<32x256xf32> to vector<8x256xf32>
    %31 = vector.extract_strided_slice %29 {offsets = [8, 0], sizes = [8, 256], strides = [1, 1]} : vector<32x256xf32> to vector<8x256xf32>
    %32 = vector.extract_strided_slice %29 {offsets = [16, 0], sizes = [8, 256], strides = [1, 1]} : vector<32x256xf32> to vector<8x256xf32>
    %33 = vector.extract_strided_slice %29 {offsets = [24, 0], sizes = [8, 256], strides = [1, 1]} : vector<32x256xf32> to vector<8x256xf32>
    %34 = arith.negf %30 : vector<8x256xf32>
    %35 = math.exp %34 : vector<8x256xf32>
    %cst_15 = arith.constant 1.000000e+00 : f32
    %36 = vector.broadcast %cst_15 : f32 to vector<8x256xf32>
    %37 = arith.addf %36, %35 : vector<8x256xf32>
    %38 = arith.divf %36, %37 : vector<8x256xf32>
    %39 = arith.negf %31 : vector<8x256xf32>
    %40 = math.exp %39 : vector<8x256xf32>
    %cst_16 = arith.constant 1.000000e+00 : f32
    %41 = vector.broadcast %cst_16 : f32 to vector<8x256xf32>
    %42 = arith.addf %41, %40 : vector<8x256xf32>
    %43 = arith.divf %41, %42 : vector<8x256xf32>
    %44 = arith.negf %32 : vector<8x256xf32>
    %45 = math.exp %44 : vector<8x256xf32>
    %cst_17 = arith.constant 1.000000e+00 : f32
    %46 = vector.broadcast %cst_17 : f32 to vector<8x256xf32>
    %47 = arith.addf %46, %45 : vector<8x256xf32>
    %48 = arith.divf %46, %47 : vector<8x256xf32>
    %49 = math.tanh %33 : vector<8x256xf32>
    %c0_18 = arith.constant 0 : index
    %c0_19 = arith.constant 0 : index
    %c0_20 = arith.constant 0 : index
    %50 = vector.load %arg6[%c0_18, %c0_19, %c0_20] : memref<1x8x256xf32, #tpu.memory_space<vmem>>, vector<1x8x256xf32>
    %51 = vector.shape_cast %50 : vector<1x8x256xf32> to vector<8x256xf32>
    %52 = arith.mulf %43, %51 : vector<8x256xf32>
    %53 = arith.mulf %38, %49 : vector<8x256xf32>
    %54 = arith.addf %52, %53 : vector<8x256xf32>
    %55 = math.tanh %54 : vector<8x256xf32>
    %56 = arith.mulf %48, %55 : vector<8x256xf32>
    %c0_21 = arith.constant 0 : index
    %c0_22 = arith.constant 0 : index
    %c0_23 = arith.constant 0 : index
    %57 = vector.load %arg7[%c0_21, %c0_22, %c0_23] : memref<1x8x256xf32, #tpu.memory_space<vmem>>, vector<1x8x256xf32>
    %58 = vector.shape_cast %57 : vector<1x8x256xf32> to vector<8x256xf32>
    %59 = vector.shape_cast %56 : vector<8x256xf32> to vector<1x8x256xf32>
    tpu.vector_store %arg7[%c0_21, %c0_22, %c0_23], %59 {strides = array<i32>} : memref<1x8x256xf32, #tpu.memory_space<vmem>>, vector<1x8x256xf32>,
    %c0_24 = arith.constant 0 : index
    %c0_25 = arith.constant 0 : index
    %c0_26 = arith.constant 0 : index
    %60 = vector.load %arg8[%c0_24, %c0_25, %c0_26] : memref<1x8x256xf32, #tpu.memory_space<vmem>>, vector<1x8x256xf32>
    %61 = vector.shape_cast %60 : vector<1x8x256xf32> to vector<8x256xf32>
    %62 = vector.shape_cast %54 : vector<8x256xf32> to vector<1x8x256xf32>
    tpu.vector_store %arg8[%c0_24, %c0_25, %c0_26], %62 {strides = array<i32>} : memref<1x8x256xf32, #tpu.memory_space<vmem>>, vector<1x8x256xf32>,
    return
  }
  func.func @transform_0(%arg0: i32) -> (i32, i32, i32) {
    %c0_i32 = arith.constant 0 : i32
    %c0_i32_0 = arith.constant 0 : i32
    %c0_i32_1 = arith.constant 0 : i32
    return %arg0, %c0_i32, %c0_i32_0 : i32, i32, i32
  }
  func.func @transform_1(%arg0: i32) -> (i32, i32) {
    %c0_i32 = arith.constant 0 : i32
    %c0_i32_0 = arith.constant 0 : i32
    %c0_i32_1 = arith.constant 0 : i32
    return %c0_i32, %c0_i32_0 : i32, i32
  }
  func.func @transform_2(%arg0: i32) -> (i32, i32) {
    %c0_i32 = arith.constant 0 : i32
    %c0_i32_0 = arith.constant 0 : i32
    %c0_i32_1 = arith.constant 0 : i32
    return %c0_i32, %c0_i32_0 : i32, i32
  }
  func.func @transform_3(%arg0: i32) -> (i32, i32) {
    %c0_i32 = arith.constant 0 : i32
    %c0_i32_0 = arith.constant 0 : i32
    %c0_i32_1 = arith.constant 0 : i32
    return %c0_i32, %c0_i32_0 : i32, i32
  }
  func.func @transform_4(%arg0: i32) -> (i32, i32) {
    %c0_i32 = arith.constant 0 : i32
    %c0_i32_0 = arith.constant 0 : i32
    %c0_i32_1 = arith.constant 0 : i32
    return %c0_i32, %c0_i32_0 : i32, i32
  }
  func.func @transform_5(%arg0: i32) -> (i32, i32, i32) {
    %c0_i32 = arith.constant 0 : i32
    %c0_i32_0 = arith.constant 0 : i32
    %c0_i32_1 = arith.constant 0 : i32
    return %arg0, %c0_i32, %c0_i32_0 : i32, i32, i32
  }
  func.func @transform_6(%arg0: i32) -> (i32, i32, i32) {
    %c0_i32 = arith.constant 0 : i32
    %c0_i32_0 = arith.constant 0 : i32
    %c0_i32_1 = arith.constant 0 : i32
    return %arg0, %c0_i32, %c0_i32_0 : i32, i32, i32
  }
  func.func @transform_7(%arg0: i32) -> (i32, i32, i32) {
    %c0_i32 = arith.constant 0 : i32
    %c0_i32_0 = arith.constant 0 : i32
    %c0_i32_1 = arith.constant 0 : i32
    return %arg0, %c0_i32, %c0_i32_0 : i32, i32, i32
  }
}

</mosaic_0001>

<llo_original>
// kernel: tpu_custom_call.1
$region0: #{tpu_custom_call.1}
  #allocation0 [shape = 'u32[]', space=smem, size = 0x4, offset = 0x4, fixed_abs, tag = 'smem constant byte address 0x4 - core index']
  #allocation1 [shape = 'u32[144,128]{1,0:T(1,128)}', space=vmem, size = 0x12000, scoped, tag = 'internal scratch']
  %s0 = inlined_call_operand.hbm [shape: f32[2,128,256], index: 0, kind: input, shape index: {}]
  %s1 = inlined_call_operand.vmem [shape: f32[32,128], index: 1, kind: input, shape index: {}]
  %s2 = inlined_call_operand.vmem [shape: f32[32,1], index: 2, kind: input, shape index: {}]
  %s3 = inlined_call_operand.hbm [shape: f32[32,256], index: 3, kind: input, shape index: {}]
  %s4 = inlined_call_operand.hbm [shape: f32[32,256], index: 4, kind: input, shape index: {}]
  %s5 = inlined_call_operand.hbm [shape: f32[2,8,256], index: 5, kind: input, shape index: {}]
  %s6 = inlined_call_operand.hbm [shape: f32[2,8,256], index: 6, kind: output, shape index: {0}]
  %s7 = inlined_call_operand.hbm [shape: f32[2,8,256], index: 7, kind: output, shape index: {1}]
  %8 = xla_tuple %s6, %s7
  %s9 = sld [smem:[#allocation0]]
  $region81: #{tpu_custom_call.1} parent=0
    _
  %s11 = ssub.s32 1, %s9
  %s12 = scalar_select 0, %s11, %s9
  $region1: #{tpu_custom_call.1} parent=0
    #allocation2 [shape = 'u8[262144]{0}', space=vmem, size = 0x40000, scoped, tag = 'input window, operand 0']
    #allocation3 [shape = 's32[2]{0}', space=sflag, size = 0x8, scoped, tag = 'scoped memory for tpu_custom_call.1']
    #allocation4 [shape = 's32[2]{0}', space=sflag, size = 0x8, scoped, tag = 'scoped memory for tpu_custom_call.1']
    #allocation5 [shape = 'u8[32768]{0}', space=vmem, size = 0x8000, scoped, tag = 'input window, operand 3, single buffered']
    #allocation6 [shape = 's32[1]{0}', space=sflag, size = 0x4, scoped, tag = 'scoped memory for tpu_custom_call.1']
    #allocation7 [shape = 'u8[32768]{0}', space=vmem, size = 0x8000, scoped, tag = 'input window, operand 4, single buffered']
    #allocation8 [shape = 'u8[16384]{0}', space=vmem, size = 0x4000, scoped, tag = 'input window, operand 5']
    #allocation9 [shape = 's32[2]{0}', space=sflag, size = 0x8, scoped, tag = 'scoped memory for tpu_custom_call.1']
    #allocation10 [shape = 'u8[16384]{0}', space=vmem, size = 0x4000, scoped, tag = 'output window, operand 0']
    #allocation11 [shape = 'u8[16384]{0}', space=vmem, size = 0x4000, scoped, tag = 'output window, operand 1']
    #allocation12 [shape = 's32[2]{0}', space=sflag, size = 0x8, scoped, tag = 'scoped memory for tpu_custom_call.1']
    %13 = vsyncpa [#allocation3], 0
    %s14 = scalar_lea.sflag [#allocation3], 1
    %15 = vsyncpa %s14, 0
    %16 = vsyncpa [#allocation6], 0
    %17 = vsyncpa [#allocation9], 0
    %s18 = scalar_lea.sflag [#allocation9], 1
    %19 = vsyncpa %s18, 0
    %20 = vsyncpa [#allocation4], 0
    %s21 = scalar_lea.sflag [#allocation4], 1
    %22 = vsyncpa %s21, 0
    %23 = vsyncpa [#allocation12], 0
    %s24 = scalar_lea.sflag [#allocation12], 1
    %25 = vsyncpa %s24, 0
    loop: start=0, step=1, limit=4
    $region2: #{tpu_custom_call.1} parent=1 // loop_pre_header
      _
    $region3: #{tpu_custom_call.1} parent=1 // loop_header
      %s27 = sphi 0, %s31
      %p28 = scmp.ge.s32.totalorder %s27, 4
      %s37 = sphi 0, %s39
      %s40 = sphi 0, %s37
      %s41 = sphi 0, %s40
      %s57 = sphi 0, %s41
      %s61 = sphi 0, %s61
      %s63 = sphi 0, %s61
      %s64 = sphi 0, %s63
      %s78 = sphi 0, %s64
      %s82 = sphi 0, %s82
      %s84 = sphi 0, %s82
      %s85 = sphi 0, %s84
      %s99 = sphi 0, %s85
      %s103 = sphi 0, %s103
      %s105 = sphi 0, %s103
      %s106 = sphi 0, %s105
      %s120 = sphi 0, %s106
      %s124 = sphi 0, %s124
      %s126 = sphi 0, %s124
      %s127 = sphi 0, %s126
      %s141 = sphi 0, %s127
      %s147 = sphi 0, %s149
      %s150 = sphi 0, %s147
      %s151 = sphi 0, %s150
      %s167 = sphi 0, %s151
      %s173 = sphi 0, %s175
      %s176 = sphi 0, %s173
      %s177 = sphi 0, %s176
      %s193 = sphi 0, %s177
      %s199 = sphi 0, %s201
      %s202 = sphi 0, %s199
      %s203 = sphi 0, %s202
      %s219 = sphi 0, %s203
    $region4: #{tpu_custom_call.1} parent=1 // loop_header_branch
      %30 = sbr.rel (%p28) target = $region8
    $region5: #{tpu_custom_call.1} parent=1 // loop_body
      %s32 = ssub.s32 %s27, 1
      %s33 = ssub.s32 %s27, 2
      %s34 = sadd.s32 %s27, 1
      %s35 = ssub.s32 %s27, %s34
      %p36 = scmp.eq.s32.totalorder %s35, 0
      %s38 = sadd.s32 %s37, 1
      %s39 = scalar_select %p36, %s37, %s38
      %p42 = pneg %p36
      %p43 = scmp.eq.s32.totalorder %s27, 1
      %p44 = por %p42, %p43
      %p45 = scmp.ne.s32.totalorder %s37, %s40
      %p46 = scmp.eq.s32.totalorder %s27, 0
      %p47 = por %p45, %p46
      %p48 = scmp.ne.s32.totalorder %s37, %s40
      %p49 = scmp.eq.s32.totalorder %s32, 1
      %p50 = por %p48, %p49
      %p51 = scmp.ne.s32.totalorder %s40, %s41
      %p52 = scmp.eq.s32.totalorder %s32, 0
      %p53 = por %p51, %p52
      %p54 = scmp.ne.s32.totalorder %s40, %s41
      %p55 = scmp.eq.s32.totalorder %s33, 1
      %p56 = por %p54, %p55
      %p58 = scmp.ne.s32.totalorder %s41, %s57
      %p59 = scmp.eq.s32.totalorder %s33, 0
      %p60 = por %p58, %p59
      %s62 = sadd.s32 %s61, 1
      %p65 = scmp.eq.s32.totalorder %s27, 1
      %p66 = scmp.ne.s32.totalorder %s61, %s63
      %p67 = scmp.eq.s32.totalorder %s27, 0
      %p68 = por %p66, %p67
      %p69 = scmp.ne.s32.totalorder %s61, %s63
      %p70 = scmp.eq.s32.totalorder %s32, 1
      %p71 = por %p69, %p70
      %p72 = scmp.ne.s32.totalorder %s63, %s64
      %p73 = scmp.eq.s32.totalorder %s32, 0
      %p74 = por %p72, %p73
      %p75 = scmp.ne.s32.totalorder %s63, %s64
      %p76 = scmp.eq.s32.totalorder %s33, 1
      %p77 = por %p75, %p76
      %p79 = scmp.ne.s32.totalorder %s64, %s78
      %p80 = scmp.eq.s32.totalorder %s33, 0
      %p81 = por %p79, %p80
      %s83 = sadd.s32 %s82, 1
      %p86 = scmp.eq.s32.totalorder %s27, 1
      %p87 = scmp.ne.s32.totalorder %s82, %s84
      %p88 = scmp.eq.s32.totalorder %s27, 0
      %p89 = por %p87, %p88
      %p90 = scmp.ne.s32.totalorder %s82, %s84
      %p91 = scmp.eq.s32.totalorder %s32, 1
      %p92 = por %p90, %p91
      %p93 = scmp.ne.s32.totalorder %s84, %s85
      %p94 = scmp.eq.s32.totalorder %s32, 0
      %p95 = por %p93, %p94
      %p96 = scmp.ne.s32.totalorder %s84, %s85
      %p97 = scmp.eq.s32.totalorder %s33, 1
      %p98 = por %p96, %p97
      %p100 = scmp.ne.s32.totalorder %s85, %s99
      %p101 = scmp.eq.s32.totalorder %s33, 0
      %p102 = por %p100, %p101
      %s104 = sadd.s32 %s103, 1
      %p107 = scmp.eq.s32.totalorder %s27, 1
      %p108 = scmp.ne.s32.totalorder %s103, %s105
      %p109 = scmp.eq.s32.totalorder %s27, 0
      %p110 = por %p108, %p109
      %p111 = scmp.ne.s32.totalorder %s103, %s105
      %p112 = scmp.eq.s32.totalorder %s32, 1
      %p113 = por %p111, %p112
      %p114 = scmp.ne.s32.totalorder %s105, %s106
      %p115 = scmp.eq.s32.totalorder %s32, 0
      %p116 = por %p114, %p115
      %p117 = scmp.ne.s32.totalorder %s105, %s106
      %p118 = scmp.eq.s32.totalorder %s33, 1
      %p119 = por %p117, %p118
      %p121 = scmp.ne.s32.totalorder %s106, %s120
      %p122 = scmp.eq.s32.totalorder %s33, 0
      %p123 = por %p121, %p122
      %s125 = sadd.s32 %s124, 1
      %p128 = scmp.eq.s32.totalorder %s27, 1
      %p129 = scmp.ne.s32.totalorder %s124, %s126
      %p130 = scmp.eq.s32.totalorder %s27, 0
      %p131 = por %p129, %p130
      %p132 = scmp.ne.s32.totalorder %s124, %s126
      %p133 = scmp.eq.s32.totalorder %s32, 1
      %p134 = por %p132, %p133
      %p135 = scmp.ne.s32.totalorder %s126, %s127
      %p136 = scmp.eq.s32.totalorder %s32, 0
      %p137 = por %p135, %p136
      %p138 = scmp.ne.s32.totalorder %s126, %s127
      %p139 = scmp.eq.s32.totalorder %s33, 1
      %p140 = por %p138, %p139
      %p142 = scmp.ne.s32.totalorder %s127, %s141
      %p143 = scmp.eq.s32.totalorder %s33, 0
      %p144 = por %p142, %p143
      %s145 = ssub.s32 %s27, %s34
      %p146 = scmp.eq.s32.totalorder %s145, 0
      %s148 = sadd.s32 %s147, 1
      %s149 = scalar_select %p146, %s147, %s148
      %p152 = pneg %p146
      %p153 = scmp.eq.s32.totalorder %s27, 1
      %p154 = por %p152, %p153
      %p155 = scmp.ne.s32.totalorder %s147, %s150
      %p156 = scmp.eq.s32.totalorder %s27, 0
      %p157 = por %p155, %p156
      %p158 = scmp.ne.s32.totalorder %s147, %s150
      %p159 = scmp.eq.s32.totalorder %s32, 1
      %p160 = por %p158, %p159
      %p161 = scmp.ne.s32.totalorder %s150, %s151
      %p162 = scmp.eq.s32.totalorder %s32, 0
      %p163 = por %p161, %p162
      %p164 = scmp.ne.s32.totalorder %s150, %s151
      %p165 = scmp.eq.s32.totalorder %s33, 1
      %p166 = por %p164, %p165
      %p168 = scmp.ne.s32.totalorder %s151, %s167
      %p169 = scmp.eq.s32.totalorder %s33, 0
      %p170 = por %p168, %p169
      %s171 = ssub.s32 %s27, %s34
      %p172 = scmp.eq.s32.totalorder %s171, 0
      %s174 = sadd.s32 %s173, 1
      %s175 = scalar_select %p172, %s173, %s174
      %p178 = pneg %p172
      %p179 = scmp.eq.s32.totalorder %s27, 1
      %p180 = por %p178, %p179
      %p181 = scmp.ne.s32.totalorder %s173, %s176
      %p182 = scmp.eq.s32.totalorder %s27, 0
      %p183 = por %p181, %p182
      %p184 = scmp.ne.s32.totalorder %s173, %s176
      %p185 = scmp.eq.s32.totalorder %s32, 1
      %p186 = por %p184, %p185
      %p187 = scmp.ne.s32.totalorder %s176, %s177
      %p188 = scmp.eq.s32.totalorder %s32, 0
      %p189 = por %p187, %p188
      %p190 = scmp.ne.s32.totalorder %s176, %s177
      %p191 = scmp.eq.s32.totalorder %s33, 1
      %p192 = por %p190, %p191
      %p194 = scmp.ne.s32.totalorder %s177, %s193
      %p195 = scmp.eq.s32.totalorder %s33, 0
      %p196 = por %p194, %p195
      %s197 = ssub.s32 %s27, %s34
      %p198 = scmp.eq.s32.totalorder %s197, 0
      %s200 = sadd.s32 %s199, 1
      %s201 = scalar_select %p198, %s199, %s200
      %p204 = pneg %p198
      %p205 = scmp.eq.s32.totalorder %s27, 1
      %p206 = por %p204, %p205
      %p207 = scmp.ne.s32.totalorder %s199, %s202
      %p208 = scmp.eq.s32.totalorder %s27, 0
      %p209 = por %p207, %p208
      %p210 = scmp.ne.s32.totalorder %s199, %s202
      %p211 = scmp.eq.s32.totalorder %s32, 1
      %p212 = por %p210, %p211
      %p213 = scmp.ne.s32.totalorder %s202, %s203
      %p214 = scmp.eq.s32.totalorder %s32, 0
      %p215 = por %p213, %p214
      %p216 = scmp.ne.s32.totalorder %s202, %s203
      %p217 = scmp.eq.s32.totalorder %s33, 1
      %p218 = por %p216, %p217
      %p220 = scmp.ne.s32.totalorder %s203, %s219
      %p221 = scmp.eq.s32.totalorder %s33, 0
      %p222 = por %p220, %p221
      %p223 = scmp.le.s32.totalorder 1, %s27
      %p224 = scmp.lt.s32.totalorder %s27, 3
      %p225 = pnand %p223, %p224
      %p226 = pneg %p225
      // Predicated region
      $region9: #{tpu_custom_call.1} parent=5 // pred_check
        _
      $region10: #{tpu_custom_call.1} parent=5 // pred_check_branch
        %228 = sbr.rel (%p225) target = $region12
      $region11: #{tpu_custom_call.1} parent=5 // pred_region
        %s229 = ssub.s32 %s27, 1
        // Predicated region
        $region13: #{tpu_custom_call.1} parent=11 // pred_check
          %p230 = pneg %p74
        $region14: #{tpu_custom_call.1} parent=11 // pred_check_branch
          %232 = sbr.rel (%p230) target = $region16
        $region15: #{tpu_custom_call.1} parent=11 // pred_region
          _
        $region16: #{tpu_custom_call.1} parent=11 // pred_fallthru
          _
        // Predicated region
        $region17: #{tpu_custom_call.1} parent=11 // pred_check
          %p233 = pneg %p95
        $region18: #{tpu_custom_call.1} parent=11 // pred_check_branch
          %235 = sbr.rel (%p233) target = $region20
        $region19: #{tpu_custom_call.1} parent=11 // pred_region
          _
        $region20: #{tpu_custom_call.1} parent=11 // pred_fallthru
          _
        // Predicated region
        $region21: #{tpu_custom_call.1} parent=11 // pred_check
          %p236 = pneg %p116
        $region22: #{tpu_custom_call.1} parent=11 // pred_check_branch
          %238 = sbr.rel (%p236) target = $region24
        $region23: #{tpu_custom_call.1} parent=11 // pred_region
          %s240 = ssub.s32 1024, 1024
          %241 = vsyncadd [#allocation6], %s240
          %s242 = sshll.u32 [#allocation5], 4
          %s243 = int_to_ptr.vmem [resolvable:$true] %s242
          %248 = dma.hbm_to_vmem [thread:$0]  %s3, 1024, %s243, [#allocation6], 256, 256, 16
        $region24: #{tpu_custom_call.1} parent=11 // pred_fallthru
          _
        // Predicated region
        $region25: #{tpu_custom_call.1} parent=11 // pred_check
          %p249 = pneg %p137
        $region26: #{tpu_custom_call.1} parent=11 // pred_check_branch
          %251 = sbr.rel (%p249) target = $region28
        $region27: #{tpu_custom_call.1} parent=11 // pred_region
          %s253 = ssub.s32 1024, 1024
          %254 = vsyncadd [#allocation6], %s253
          %s255 = sshll.u32 [#allocation7], 4
          %s256 = int_to_ptr.vmem [resolvable:$true] %s255
          %261 = dma.hbm_to_vmem [thread:$0]  %s4, 1024, %s256, [#allocation6], 256, 256, 16
        $region28: #{tpu_custom_call.1} parent=11 // pred_fallthru
          _
      $region12: #{tpu_custom_call.1} parent=5 // pred_fallthru
        _
      %p262 = scmp.lt.s32.totalorder %s27, 2
      // Predicated region
      $region29: #{tpu_custom_call.1} parent=5 // pred_check
        %p263 = pneg %p262
      $region30: #{tpu_custom_call.1} parent=5 // pred_check_branch
        %265 = sbr.rel (%p263) target = $region32
      $region31: #{tpu_custom_call.1} parent=5 // pred_region
        // Predicated region
        $region33: #{tpu_custom_call.1} parent=31 // pred_check
          %p266 = pneg %p47
        $region34: #{tpu_custom_call.1} parent=31 // pred_check_branch
          %268 = sbr.rel (%p266) target = $region36
        $region35: #{tpu_custom_call.1} parent=31 // pred_region
          %s269 = sand.u32 %s37, 1
          %s270 = scalar_lea.sflag [#allocation3], %s269
          %s271 = sand.u32 %s37, 1
          %s272 = smul.addr %s271, 256
          %s273 = scalar_lea.vmem [#allocation2], %s272
          %s275 = ssub.s32 4096, 4096
          %276 = vsyncadd %s270, %s275
          %s277 = smul.addr %s27, 32
          %s278 = smul.addr %s277, 128
          %s279 = scalar_lea.hbm %s0, %s278
          %s280 = sshll.u32 %s273, 4
          %s281 = int_to_ptr.vmem [resolvable:$true] %s280
          %286 = dma.hbm_to_vmem [thread:$0]  %s279, 4096, %s281, %s270, 256, 256, 16
        $region36: #{tpu_custom_call.1} parent=31 // pred_fallthru
          _
        // Predicated region
        $region37: #{tpu_custom_call.1} parent=31 // pred_check
          %p287 = pneg %p157
        $region38: #{tpu_custom_call.1} parent=31 // pred_check_branch
          %289 = sbr.rel (%p287) target = $region40
        $region39: #{tpu_custom_call.1} parent=31 // pred_region
          %s290 = sand.u32 %s147, 1
          %s291 = scalar_lea.sflag [#allocation9], %s290
          %s292 = sand.u32 %s147, 1
          %s293 = smul.addr %s292, 16
          %s294 = scalar_lea.vmem [#allocation8], %s293
          %s296 = ssub.s32 256, 256
          %297 = vsyncadd %s291, %s296
          %s298 = smul.addr %s27, 2
          %s299 = smul.addr %s298, 128
          %s300 = scalar_lea.hbm %s5, %s299
          %s302 = sshll.u32 %s294, 4
          %s303 = int_to_ptr.vmem [resolvable:$true] %s302
          %305 = dma.hbm_to_vmem [thread:$0]  %s300, 256, %s303, %s291
        $region40: #{tpu_custom_call.1} parent=31 // pred_fallthru
          _
      $region32: #{tpu_custom_call.1} parent=5 // pred_fallthru
        _
      %p306 = scmp.le.s32.totalorder 1, %s27
      %p307 = scmp.lt.s32.totalorder %s27, 3
      %p308 = pnand %p306, %p307
      %p309 = pneg %p308
      // Predicated region
      $region41: #{tpu_custom_call.1} parent=5 // pred_check
        _
      $region42: #{tpu_custom_call.1} parent=5 // pred_check_branch
        %311 = sbr.rel (%p308) target = $region44
      $region43: #{tpu_custom_call.1} parent=5 // pred_region
        %s312 = ssub.s32 %s27, 1
        %s313 = sand.u32 %s40, 1
        %s314 = scalar_lea.sflag [#allocation3], %s313
        %s315 = sand.u32 %s40, 1
        %s316 = smul.addr %s315, 256
        %s317 = scalar_lea.vmem [#allocation2], %s316
        // Predicated region
        $region45: #{tpu_custom_call.1} parent=43 // pred_check
          %p318 = pneg %p53
        $region46: #{tpu_custom_call.1} parent=43 // pred_check_branch
          %320 = sbr.rel (%p318) target = $region48
        $region47: #{tpu_custom_call.1} parent=43 // pred_region
          %321 = dma.done %s314, 4096
        $region48: #{tpu_custom_call.1} parent=43 // pred_fallthru
          _
        // Predicated region
        $region49: #{tpu_custom_call.1} parent=43 // pred_check
          %p322 = pneg %p116
        $region50: #{tpu_custom_call.1} parent=43 // pred_check_branch
          %324 = sbr.rel (%p322) target = $region52
        $region51: #{tpu_custom_call.1} parent=43 // pred_region
          %325 = dma.done [#allocation6], 1024
        $region52: #{tpu_custom_call.1} parent=43 // pred_fallthru
          _
        // Predicated region
        $region53: #{tpu_custom_call.1} parent=43 // pred_check
          %p326 = pneg %p137
        $region54: #{tpu_custom_call.1} parent=43 // pred_check_branch
          %328 = sbr.rel (%p326) target = $region56
        $region55: #{tpu_custom_call.1} parent=43 // pred_region
          %329 = dma.done [#allocation6], 1024
        $region56: #{tpu_custom_call.1} parent=43 // pred_fallthru
          _
        %s330 = sand.u32 %s150, 1
        %s331 = scalar_lea.sflag [#allocation9], %s330
        %s332 = sand.u32 %s150, 1
        %s333 = smul.addr %s332, 16
        %s334 = scalar_lea.vmem [#allocation8], %s333
        // Predicated region
        $region57: #{tpu_custom_call.1} parent=43 // pred_check
          %p335 = pneg %p163
        $region58: #{tpu_custom_call.1} parent=43 // pred_check_branch
          %337 = sbr.rel (%p335) target = $region60
        $region59: #{tpu_custom_call.1} parent=43 // pred_region
          %338 = dma.done %s331, 256
        $region60: #{tpu_custom_call.1} parent=43 // pred_fallthru
          _
        %s339 = sand.u32 %s40, 1
        %s340 = scalar_lea.sflag [#allocation3], %s339
        %s341 = sand.u32 %s40, 1
        %s342 = smul.addr %s341, 256
        %s343 = scalar_lea.vmem [#allocation2], %s342
        %p344 = pneg %p53
        %p345 = pneg %p50
        %p346 = pneg %p74
        %p347 = pneg %p71
        %p348 = pneg %p95
        %p349 = pneg %p92
        %p350 = pneg %p116
        %p351 = pneg %p113
        %p352 = pneg %p137
        %p353 = pneg %p134
        %s354 = sand.u32 %s150, 1
        %s355 = scalar_lea.sflag [#allocation9], %s354
        %s356 = sand.u32 %s150, 1
        %s357 = smul.addr %s356, 16
        %s358 = scalar_lea.vmem [#allocation8], %s357
        %p359 = pneg %p163
        %p360 = pneg %p160
        %p361 = pneg %p189
        %p362 = pneg %p186
        %s363 = sand.u32 %s176, 1
        %s364 = scalar_lea.sflag [#allocation4], %s363
        %s365 = sand.u32 %s176, 1
        %s366 = smul.addr %s365, 16
        %s367 = scalar_lea.vmem [#allocation10], %s366
        %p368 = pneg %p215
        %p369 = pneg %p212
        %s370 = sand.u32 %s202, 1
        %s371 = scalar_lea.sflag [#allocation12], %s370
        %s372 = sand.u32 %s202, 1
        %s373 = smul.addr %s372, 16
        %s374 = scalar_lea.vmem [#allocation11], %s373
        %v375 = vld [vmem:[%s1] sm:$0xff]
        %v376 = vld [vmem:[%s1 + $0x8] sm:$0xff]
        %v377 = vld [vmem:[%s1 + $0x10] sm:$0xff]
        %v378 = vld [vmem:[%s1 + $0x18] sm:$0xff]
        %v379 = vld [vmem:[%s317] sm:$0xff]
        %v380 = vld [vmem:[%s317 + $0x8] sm:$0xff]
        %v381 = vld [vmem:[%s317 + $0x10] sm:$0xff]
        %v382 = vld [vmem:[%s317 + $0x18] sm:$0xff]
        %v383 = vld [vmem:[%s317 + $0x20] sm:$0xff]
        %v384 = vld [vmem:[%s317 + $0x28] sm:$0xff]
        %v385 = vld [vmem:[%s317 + $0x30] sm:$0xff]
        %v386 = vld [vmem:[%s317 + $0x38] sm:$0xff]
        %v387 = vld [vmem:[%s317 + $0x40] sm:$0xff]
        %v388 = vld [vmem:[%s317 + $0x48] sm:$0xff]
        %v389 = vld [vmem:[%s317 + $0x50] sm:$0xff]
        %v390 = vld [vmem:[%s317 + $0x58] sm:$0xff]
        %v391 = vld [vmem:[%s317 + $0x60] sm:$0xff]
        %v392 = vld [vmem:[%s317 + $0x68] sm:$0xff]
        %v393 = vld [vmem:[%s317 + $0x70] sm:$0xff]
        %v394 = vld [vmem:[%s317 + $0x78] sm:$0xff]
        %v395 = vld [vmem:[%s317 + $0x80] sm:$0xff]
        %v396 = vld [vmem:[%s317 + $0x88] sm:$0xff]
        %v397 = vld [vmem:[%s317 + $0x90] sm:$0xff]
        %v398 = vld [vmem:[%s317 + $0x98] sm:$0xff]
        %v399 = vld [vmem:[%s317 + $0xa0] sm:$0xff]
        %v400 = vld [vmem:[%s317 + $0xa8] sm:$0xff]
        %v401 = vld [vmem:[%s317 + $0xb0] sm:$0xff]
        %v402 = vld [vmem:[%s317 + $0xb8] sm:$0xff]
        %v403 = vld [vmem:[%s317 + $0xc0] sm:$0xff]
        %v404 = vld [vmem:[%s317 + $0xc8] sm:$0xff]
        %v405 = vld [vmem:[%s317 + $0xd0] sm:$0xff]
        %v406 = vld [vmem:[%s317 + $0xd8] sm:$0xff]
        %v407 = vld [vmem:[%s317 + $0xe0] sm:$0xff]
        %v408 = vld [vmem:[%s317 + $0xe8] sm:$0xff]
        %v409 = vld [vmem:[%s317 + $0xf0] sm:$0xff]
        %v410 = vld [vmem:[%s317 + $0xf8] sm:$0xff]
        %v411 = vld [vmem:[%s2] sm:$0xff]
        %v412 = vld [vmem:[%s2 + $0x8] sm:$0xff]
        %v413 = vld [vmem:[%s2 + $0x10] sm:$0xff]
        %v414 = vld [vmem:[%s2 + $0x18] sm:$0xff]
        %416 = vset.pattern.permute.xlu0 0
        %417 = vperm.xlu0 %416, %v411
        %v418 = vpop.permute.xlu0 %417
        %421 = vset.pattern.permute.xlu0 0
        %422 = vperm.xlu0 %421, %v412
        %v423 = vpop.permute.xlu0 %422
        %426 = vset.pattern.permute.xlu0 0
        %427 = vperm.xlu0 %426, %v413
        %v428 = vpop.permute.xlu0 %427
        %431 = vset.pattern.permute.xlu0 0
        %432 = vperm.xlu0 %431, %v414
        %v433 = vpop.permute.xlu0 %432
        %435 = vmatprep.subr.mxu0 %v410
        %436 = vmatpush1.msra.mxu0 %v409
        %437 = vmatprep.subr.mxu0 %v408
        %438 = vmatpush1.msra.mxu0 %v407
        %439 = vmatprep.subr.mxu0 %v406
        %440 = vmatpush1.msra.mxu0 %v405
        %441 = vmatprep.subr.mxu0 %v404
        %442 = vmatpush1.msra.mxu0 %v403
        %443 = vmatprep.subr.mxu0 %v402
        %444 = vmatpush1.msra.mxu0 %v401
        %445 = vmatprep.subr.mxu0 %v400
        %446 = vmatpush1.msra.mxu0 %v399
        %447 = vmatprep.subr.mxu0 %v398
        %448 = vmatpush1.msra.mxu0 %v397
        %449 = vmatprep.subr.mxu0 %v396
        %450 = vmatpush1.msra.mxu0 %v395
        %451 = vmatprep.subr.mxu0 %v394
        %452 = vmatpush1.msra.mxu0 %v393
        %453 = vmatprep.subr.mxu0 %v392
        %454 = vmatpush1.msra.mxu0 %v391
        %455 = vmatprep.subr.mxu0 %v390
        %456 = vmatpush1.msra.mxu0 %v389
        %457 = vmatprep.subr.mxu0 %v388
        %458 = vmatpush1.msra.mxu0 %v387
        %459 = vmatprep.subr.mxu0 %v386
        %460 = vmatpush1.msra.mxu0 %v385
        %461 = vmatprep.subr.mxu0 %v384
        %462 = vmatpush1.msra.mxu0 %v383
        %463 = vmatprep.subr.mxu0 %v382
        %464 = vmatpush1.msra.mxu0 %v381
        %465 = vmatprep.subr.mxu0 %v380
        %466 = vmatpush1.msra.mxu0 %v379
        %467 = vmatprep.subr.mxu0 0.0
        %468 = vmatpush2.msra.mxu0 0.0
        %469 = vmatprep.subr.mxu0 0.0
        %470 = vmatpush2.msra.mxu0 0.0
        %471 = vmatprep.subr.mxu0 0.0
        %472 = vmatpush2.msra.mxu0 0.0
        %473 = vmatprep.subr.mxu0 0.0
        %474 = vmatpush2.msra.mxu0 0.0
        %475 = vmatprep.subr.mxu0 0.0
        %476 = vmatpush2.msra.mxu0 0.0
        %477 = vmatprep.subr.mxu0 0.0
        %478 = vmatpush2.msra.mxu0 0.0
        %479 = vmatprep.subr.mxu0 0.0
        %480 = vmatpush2.msra.mxu0 0.0
        %481 = vmatprep.subr.mxu0 0.0
        %482 = vmatpush2.msra.mxu0 0.0
        %483 = vmatprep.subr.mxu0 0.0
        %484 = vmatpush2.msra.mxu0 0.0
        %485 = vmatprep.subr.mxu0 0.0
        %486 = vmatpush2.msra.mxu0 0.0
        %487 = vmatprep.subr.mxu0 0.0
        %488 = vmatpush2.msra.mxu0 0.0
        %489 = vmatprep.subr.mxu0 0.0
        %490 = vmatpush2.msra.mxu0 0.0
        %491 = vmatprep.subr.mxu0 0.0
        %492 = vmatpush2.msra.mxu0 0.0
        %493 = vmatprep.subr.mxu0 0.0
        %494 = vmatpush2.msra.mxu0 0.0
        %495 = vmatprep.subr.mxu0 0.0
        %496 = vmatpush2.msra.mxu0 0.0
        %497 = vmatprep.subr.mxu0 0.0
        %498 = vmatpush2.msra.mxu0 0.0
        %499 = vmatprep.mubr.f32.mxu0 0.0
        %500 = vmatmul.mubr.f32.gmra.mxu0 %v375
        %v501 = vpop.f32.mrf.mxu0
        %v502 = vadd.f32 %v418, %v501
        %v503 = vpop.f32.mrf.mxu0
        %v504 = vadd.f32 %v418, %v503
        %505 = vmatprep.mubr.f32.mxu0 0.0
        %506 = vmatmul.mubr.f32.gmra.mxu0 %v376
        %v507 = vpop.f32.mrf.mxu0
        %v508 = vadd.f32 %v423, %v507
        %v509 = vpop.f32.mrf.mxu0
        %v510 = vadd.f32 %v423, %v509
        %511 = vmatprep.mubr.f32.mxu0 0.0
        %512 = vmatmul.mubr.f32.gmra.mxu0 %v377
        %v513 = vpop.f32.mrf.mxu0
        %v514 = vadd.f32 %v428, %v513
        %v515 = vpop.f32.mrf.mxu0
        %v516 = vadd.f32 %v428, %v515
        %517 = vmatprep.mubr.f32.mxu0 0.0
        %518 = vmatmul.mubr.f32.gmra.mxu0 %v378
        %v519 = vpop.f32.mrf.mxu0
        %v520 = vadd.f32 %v433, %v519
        %v521 = vpop.f32.mrf.mxu0
        %v522 = vadd.f32 %v433, %v521
        %523 = vdwg.mxu0
        %v524 = vadd.f32 %v502, %v504
        %v525 = vadd.f32 %v524, %v508
        %v526 = vadd.f32 %v525, %v510
        %v527 = vadd.f32 %v526, %v514
        %v528 = vadd.f32 %v527, %v516
        %v529 = vadd.f32 %v528, %v520
        %v530 = vadd.f32 %v529, %v522
        %531 = vadd.xlane.f32.xlu0 %v530
        %v532 = vpop.xlane.xlu0 %531
        %v533 = vrot.slane %v532, 4
        %v534 = vadd.f32 %v532, %v533
        %v535 = vrot.slane %v534, 2
        %v536 = vadd.f32 %v534, %v535
        %v537 = vrot.slane %v536, 1
        %v538 = vadd.f32 %v536, %v537
        %s539 = vtos %v538
        %v540 = vmul.f32 %v502, %v502
        %v541 = vmul.f32 %v504, %v504
        %v542 = vmul.f32 %v508, %v508
        %v543 = vmul.f32 %v510, %v510
        %v544 = vmul.f32 %v514, %v514
        %v545 = vmul.f32 %v516, %v516
        %v546 = vmul.f32 %v520, %v520
        %v547 = vmul.f32 %v522, %v522
        %v548 = vadd.f32 %v540, %v541
        %v549 = vadd.f32 %v548, %v542
        %v550 = vadd.f32 %v549, %v543
        %v551 = vadd.f32 %v550, %v544
        %v552 = vadd.f32 %v551, %v545
        %v553 = vadd.f32 %v552, %v546
        %v554 = vadd.f32 %v553, %v547
        %555 = vadd.xlane.f32.xlu0 %v554
        %v556 = vpop.xlane.xlu0 %555
        %v557 = vrot.slane %v556, 4
        %v558 = vadd.f32 %v556, %v557
        %v559 = vrot.slane %v558, 2
        %v560 = vadd.f32 %v558, %v559
        %v561 = vrot.slane %v560, 1
        %v562 = vadd.f32 %v560, %v561
        %s563 = vtos %v562
        %s564 = smul.f32 %s539, 0.00012207031
        %s565 = smul.f32 %s563, 0.00012207031
        %s566 = smul.f32 %s564, %s564
        %s567 = ssub.f32 %s565, %s566
        %v568 = vstv %s564
        %v569 = vsub.f32 %v502, %v568
        %v570 = vsub.f32 %v504, %v568
        %v571 = vsub.f32 %v508, %v568
        %v572 = vsub.f32 %v510, %v568
        %v573 = vsub.f32 %v514, %v568
        %v574 = vsub.f32 %v516, %v568
        %v575 = vsub.f32 %v520, %v568
        %v576 = vsub.f32 %v522, %v568
        %s577 = sadd.f32 %s567, 1e-05
        %v578 = vstv %s577
        %v579 = vrsqrt.pop %v578
        %s580 = vtos %v579
        %v581 = vstv %s580
        %v582 = vmul.f32 %v569, %v581
        %v583 = vmul.f32 %v570, %v581
        %v584 = vmul.f32 %v571, %v581
        %v585 = vmul.f32 %v572, %v581
        %v586 = vmul.f32 %v573, %v581
        %v587 = vmul.f32 %v574, %v581
        %v588 = vmul.f32 %v575, %v581
        %v589 = vmul.f32 %v576, %v581
        %v590 = vld [vmem:[#allocation5] sm:$0xff]
        %v591 = vld [vmem:[#allocation5 + $0x8] sm:$0xff]
        %v592 = vld [vmem:[#allocation5 + $0x10] sm:$0xff]
        %v593 = vld [vmem:[#allocation5 + $0x18] sm:$0xff]
        %v594 = vld [vmem:[#allocation5 + $0x20] sm:$0xff]
        %v595 = vld [vmem:[#allocation5 + $0x28] sm:$0xff]
        %v596 = vld [vmem:[#allocation5 + $0x30] sm:$0xff]
        %v597 = vld [vmem:[#allocation5 + $0x38] sm:$0xff]
        %v598 = vmul.f32 %v582, %v590
        %v599 = vmul.f32 %v583, %v591
        %v600 = vmul.f32 %v584, %v592
        %v601 = vmul.f32 %v585, %v593
        %v602 = vmul.f32 %v586, %v594
        %v603 = vmul.f32 %v587, %v595
        %v604 = vmul.f32 %v588, %v596
        %v605 = vmul.f32 %v589, %v597
        %v606 = vld [vmem:[#allocation7] sm:$0xff]
        %v607 = vld [vmem:[#allocation7 + $0x8] sm:$0xff]
        %v608 = vld [vmem:[#allocation7 + $0x10] sm:$0xff]
        %v609 = vld [vmem:[#allocation7 + $0x18] sm:$0xff]
        %v610 = vld [vmem:[#allocation7 + $0x20] sm:$0xff]
        %v611 = vld [vmem:[#allocation7 + $0x28] sm:$0xff]
        %v612 = vld [vmem:[#allocation7 + $0x30] sm:$0xff]
        %v613 = vld [vmem:[#allocation7 + $0x38] sm:$0xff]
        %v614 = vadd.f32 %v598, %v606
        %v615 = vadd.f32 %v599, %v607
        %v616 = vadd.f32 %v600, %v608
        %v617 = vadd.f32 %v601, %v609
        %v618 = vadd.f32 %v602, %v610
        %v619 = vadd.f32 %v603, %v611
        %v620 = vadd.f32 %v604, %v612
        %v621 = vadd.f32 %v605, %v613
        %v622 = vxor.u32 %v614, 2147483648
        %v623 = vxor.u32 %v615, 2147483648
        %v624 = vmul.f32 %v622, 1.442695
        %v625 = vpow.pop %v624
        %v626 = vmul.f32 %v623, 1.442695
        %v627 = vpow.pop %v626
        %v628 = vadd.f32 %v625, 1.0
        %v629 = vadd.f32 %v627, 1.0
        %v630 = vrcp.pop %v628
        %v631 = vmul.f32 1.0, %v630
        %v632 = vrcp.pop %v629
        %v633 = vmul.f32 1.0, %v632
        %v634 = vxor.u32 %v616, 2147483648
        %v635 = vxor.u32 %v617, 2147483648
        %v636 = vmul.f32 %v634, 1.442695
        %v637 = vpow.pop %v636
        %v638 = vmul.f32 %v635, 1.442695
        %v639 = vpow.pop %v638
        %v640 = vadd.f32 %v637, 1.0
        %v641 = vadd.f32 %v639, 1.0
        %v642 = vrcp.pop %v640
        %v643 = vmul.f32 1.0, %v642
        %v644 = vrcp.pop %v641
        %v645 = vmul.f32 1.0, %v644
        %v646 = vxor.u32 %v618, 2147483648
        %v647 = vxor.u32 %v619, 2147483648
        %v648 = vmul.f32 %v646, 1.442695
        %v649 = vpow.pop %v648
        %v650 = vmul.f32 %v647, 1.442695
        %v651 = vpow.pop %v650
        %v652 = vadd.f32 %v649, 1.0
        %v653 = vadd.f32 %v651, 1.0
        %v654 = vrcp.pop %v652
        %v655 = vmul.f32 1.0, %v654
        %v656 = vrcp.pop %v653
        %v657 = vmul.f32 1.0, %v656
        %v658 = vtanh.pop %v620
        %v659 = vtanh.pop %v621
        %v660 = vld [vmem:[%s334] sm:$0xff]
        %v661 = vld [vmem:[%s334 + $0x8] sm:$0xff]
        %v662 = vmul.f32 %v643, %v660
        %v663 = vmul.f32 %v645, %v661
        %v664 = vmul.f32 %v631, %v658
        %v665 = vmul.f32 %v633, %v659
        %v666 = vadd.f32 %v662, %v664
        %v667 = vadd.f32 %v663, %v665
        %v668 = vtanh.pop %v666
        %v669 = vtanh.pop %v667
        %v670 = vmul.f32 %v655, %v668
        %v671 = vmul.f32 %v657, %v669
        %672 = vst [vmem:[%s367] sm:$0xff] %v670
        %673 = vst [vmem:[%s367 + $0x8] sm:$0xff] %v671
        %674 = vst [vmem:[%s374] sm:$0xff] %v666
        %675 = vst [vmem:[%s374 + $0x8] sm:$0xff] %v667
        %s676 = sand.u32 %s176, 1
        %s677 = scalar_lea.sflag [#allocation4], %s676
        %s678 = sand.u32 %s176, 1
        %s679 = smul.addr %s678, 16
        %s680 = scalar_lea.vmem [#allocation10], %s679
        %s681 = sand.u32 %s202, 1
        %s682 = scalar_lea.sflag [#allocation12], %s681
        %s683 = sand.u32 %s202, 1
        %s684 = smul.addr %s683, 16
        %s685 = scalar_lea.vmem [#allocation11], %s684
        // Predicated region
        $region61: #{tpu_custom_call.1} parent=43 // pred_check
          %p686 = pneg %p186
        $region62: #{tpu_custom_call.1} parent=43 // pred_check_branch
          %688 = sbr.rel (%p686) target = $region64
        $region63: #{tpu_custom_call.1} parent=43 // pred_region
          %s690 = ssub.s32 256, 256
          %691 = vsyncadd %s677, %s690
          %s692 = smul.addr %s32, 2
          %s693 = smul.addr %s692, 128
          %s694 = scalar_lea.hbm %s6, %s693
          %s696 = sshll.u32 %s680, 4
          %s697 = int_to_ptr.vmem [resolvable:$true] %s696
          %699 = dma.vmem_to_hbm [thread:$0]  %s697, 256, %s694, %s677
        $region64: #{tpu_custom_call.1} parent=43 // pred_fallthru
          _
        // Predicated region
        $region65: #{tpu_custom_call.1} parent=43 // pred_check
          %p700 = pneg %p212
        $region66: #{tpu_custom_call.1} parent=43 // pred_check_branch
          %702 = sbr.rel (%p700) target = $region68
        $region67: #{tpu_custom_call.1} parent=43 // pred_region
          %s704 = ssub.s32 256, 256
          %705 = vsyncadd %s682, %s704
          %s706 = smul.addr %s32, 2
          %s707 = smul.addr %s706, 128
          %s708 = scalar_lea.hbm %s7, %s707
          %s710 = sshll.u32 %s685, 4
          %s711 = int_to_ptr.vmem [resolvable:$true] %s710
          %713 = dma.vmem_to_hbm [thread:$0]  %s711, 256, %s708, %s682
        $region68: #{tpu_custom_call.1} parent=43 // pred_fallthru
          _
      $region44: #{tpu_custom_call.1} parent=5 // pred_fallthru
        _
      %p714 = scmp.le.s32.totalorder 2, %s27
      // Predicated region
      $region69: #{tpu_custom_call.1} parent=5 // pred_check
        %p715 = pneg %p714
      $region70: #{tpu_custom_call.1} parent=5 // pred_check_branch
        %717 = sbr.rel (%p715) target = $region72
      $region71: #{tpu_custom_call.1} parent=5 // pred_region
        %s718 = ssub.s32 %s27, 2
        // Predicated region
        $region73: #{tpu_custom_call.1} parent=71 // pred_check
          %p719 = pneg %p192
        $region74: #{tpu_custom_call.1} parent=71 // pred_check_branch
          %721 = sbr.rel (%p719) target = $region76
        $region75: #{tpu_custom_call.1} parent=71 // pred_region
          %s722 = sand.u32 %s177, 1
          %s723 = scalar_lea.sflag [#allocation4], %s722
          %s724 = sand.u32 %s177, 1
          %s725 = smul.addr %s724, 16
          %s726 = scalar_lea.vmem [#allocation10], %s725
          %727 = dma.done %s723, 256
        $region76: #{tpu_custom_call.1} parent=71 // pred_fallthru
          _
        // Predicated region
        $region77: #{tpu_custom_call.1} parent=71 // pred_check
          %p728 = pneg %p218
        $region78: #{tpu_custom_call.1} parent=71 // pred_check_branch
          %730 = sbr.rel (%p728) target = $region80
        $region79: #{tpu_custom_call.1} parent=71 // pred_region
          %s731 = sand.u32 %s203, 1
          %s732 = scalar_lea.sflag [#allocation12], %s731
          %s733 = sand.u32 %s203, 1
          %s734 = smul.addr %s733, 16
          %s735 = scalar_lea.vmem [#allocation11], %s734
          %736 = dma.done %s732, 256
        $region80: #{tpu_custom_call.1} parent=71 // pred_fallthru
          _
      $region72: #{tpu_custom_call.1} parent=5 // pred_fallthru
        _
    $region6: #{tpu_custom_call.1} parent=1 // loop_footer
      %s31 = sadd.s32 1, %s27
    $region7: #{tpu_custom_call.1} parent=1 // loop_footer_branch
      %26 = sbr.rel target = $region3
    $region8: #{tpu_custom_call.1} parent=1 // loop_exit
      _
    %737 = vsyncpa [#allocation3], 1
    %s738 = scalar_lea.sflag [#allocation3], 1
    %739 = vsyncpa %s738, 1
    %740 = vsyncpa [#allocation6], 1
    %741 = vsyncpa [#allocation9], 1
    %s742 = scalar_lea.sflag [#allocation9], 1
    %743 = vsyncpa %s742, 1
    %744 = vsyncpa [#allocation4], 1
    %s745 = scalar_lea.sflag [#allocation4], 1
    %746 = vsyncpa %s745, 1
    %747 = vsyncpa [#allocation12], 1
    %s748 = scalar_lea.sflag [#allocation12], 1
    %749 = vsyncpa %s748, 1

</llo_original>
